<compile_context>
chip_gen: v6e
topology: v6e:2x2x1
jax: 0.10.0
libtpu: 0.0.40
codegen_flags: <defaults>
</compile_context>

<pallas_src>
import jax
import jax.numpy as jnp
from jax.experimental import pallas as pl
from jax.experimental.pallas import tpu as pltpu


# ---------------------------------------------------------------------------
# Kernel 1: streamed masked span sum + CLS capture.
# ---------------------------------------------------------------------------
def span_reduce_kernel(h_ref, m_ref, cls_ref, span_ref):
    """Grid = (B, S_pad // tS).  Batch first (parallel), seq-reduction last.

    h_ref:    (1, tS, H)  streamed hidden tile (input dtype)
    m_ref:    (1, tS, 1)  span-mask tile, f32, sublane-major
    cls_ref:  (1, 1, H)   f32 output, written on the first seq tile
    span_ref: (1, 1, H)   f32 output, accumulated across seq tiles
    """
    k = pl.program_id(1)

    @pl.when(k == 0)
    def _():
        span_ref[...] = jnp.zeros(span_ref.shape, span_ref.dtype)
        # CLS token (sequence position 0) lives in the k == 0 tile.
        cls_ref[...] = h_ref[:, 0:1, :].astype(cls_ref.dtype)

    # Masked sum over this sequence tile on the VPU (mul + sublane reduce):
    # keeps exact f32 accumulation and keeps the MXU off the streamed path.
    h = h_ref[0].astype(jnp.float32)                     # (tS, H)
    m = m_ref[0]                                         # (tS, 1), f32
    partial = jnp.sum(h * m, axis=0, keepdims=True)      # (1, H)
    span_ref[...] += partial[None]                       # (1, 1, H)


# ---------------------------------------------------------------------------
# Kernel 2: cat -> dense -> tanh -> out_proj over a batch block.
# ---------------------------------------------------------------------------
def span_head_mlp_kernel(cls_ref, span_ref, w1c_ref, w1s_ref, b1_ref,
                         w2_ref, b2_ref, o_ref):
    """Grid = (B_pad // tB,).  M = tB rows per MXU call; Lp is lane-dense."""
    z = (jnp.dot(cls_ref[...], w1c_ref[...], preferred_element_type=jnp.float32)
         + jnp.dot(span_ref[...], w1s_ref[...], preferred_element_type=jnp.float32)
         + b1_ref[...])
    z = jnp.tanh(z)
    out = jnp.dot(z, w2_ref[...], preferred_element_type=jnp.float32) + b2_ref[...]
    o_ref[...] = out.astype(o_ref.dtype)


# ---------------------------------------------------------------------------
# Helpers
# ---------------------------------------------------------------------------
def _round_up(x, m):
    return ((x + m - 1) // m) * m


def _vmem_capacity_bytes():
    try:
        return int(pltpu.get_tpu_info().vmem_capacity_bytes)
    except Exception:
        return 64 * 1024 * 1024  # conservative default (v7x per-core VMEM)


def _pick_seq_tiling(S, H, itemsize, vmem_cap, max_seq_tile=2048):
    """Choose (tS, S_pad): the largest sequence tile whose double-buffered
    stream fits in ~half of VMEM, as a multiple of 128 (or full S for short
    sequences).  Prefer a tile that divides S; otherwise pad S up to a tile
    multiple (the padded mask rows are zero, so they contribute nothing)."""
    budget = min(int(vmem_cap * 0.5), 64 * 1024 * 1024)
    per_row = 2 * H * itemsize + 2 * 128 * 4   # hidden + lane-padded mask, x2 buffers
    max_tile = (budget // per_row) // 128 * 128
    max_tile = max(128, min(max_seq_tile, max_tile))
    if S <= max_tile:
        return S, S
    for t in range(max_tile, 127, -128):
        if S % t == 0:
            return t, S
    return max_tile, _round_up(S, max_tile)


# ---------------------------------------------------------------------------
# Wrapper
# ---------------------------------------------------------------------------
def longformer_span_head(hidden_states, span_mask, w1_cls, w1_span, b1, w2,
                         b2, *, max_seq_tile=2048):
    B, S, H = hidden_states.shape
    L = w2.shape[1]
    out_dtype = hidden_states.dtype
    itemsize = jnp.dtype(hidden_states.dtype).itemsize

    vmem_cap = _vmem_capacity_bytes()
    vmem_clamp = min(int(vmem_cap * 0.9), 100 * 1024 * 1024)

    # ---- stage 1: streamed span-sum + CLS extraction -----------------------
    tS, S_pad = _pick_seq_tiling(S, H, itemsize, vmem_cap, max_seq_tile)
    n_seq = S_pad // tS

    # Mask in f32 (exact even for soft masks), sublane-major [B, S, 1].
    mask3 = span_mask.astype(jnp.float32).reshape(B, S, 1)
    if S_pad != S:
        # Ragged tail: pad the stream and zero the mask over the padding
        # (only triggers when no multiple-of-128 tile divides S).
        hidden_states = jnp.pad(hidden_states, ((0, 0), (0, S_pad - S), (0, 0)))
        mask3 = jnp.pad(mask3, ((0, 0), (0, S_pad - S), (0, 0)))

    stream_vmem = (2 * tS * H * itemsize       # double-buffered hidden tiles
                   + 2 * tS * 128 * 4          # lane-padded mask tiles
                   + 4 * 1024 * 1024)          # outputs + slack
    stream_vmem = min(max(stream_vmem, 16 * 1024 * 1024), vmem_clamp)

    cls_vec, span_vec = pl.pallas_call(
        span_reduce_kernel,
        out_shape=(jax.ShapeDtypeStruct((B, 1, H), jnp.float32),
                   jax.ShapeDtypeStruct((B, 1, H), jnp.float32)),
        grid_spec=pltpu.PrefetchScalarGridSpec(
            num_scalar_prefetch=0,
            grid=(B, n_seq),
            in_specs=[
                pl.BlockSpec((1, tS, H), lambda b, k: (b, k, 0)),
                pl.BlockSpec((1, tS, 1), lambda b, k: (b, k, 0)),
            ],
            out_specs=[
                pl.BlockSpec((1, 1, H), lambda b, k: (b, 0, 0)),
                pl.BlockSpec((1, 1, H), lambda b, k: (b, 0, 0)),
            ],
        ),
        compiler_params=pltpu.CompilerParams(
            dimension_semantics=("parallel", "arbitrary"),
            vmem_limit_bytes=stream_vmem,
        ),
    )(hidden_states, mask3)
    # TODO(synk): for B < 2 on dual-TensorCore parts (v7x), also split the seq
    # axis into per-core partial sums so both cores stay busy.

    cls_vec = cls_vec.reshape(B, H)
    span_vec = span_vec.reshape(B, H)

    # ---- stage 2: cat -> dense -> tanh -> out_proj (tiny, batch-blocked) ---
    Lp = _round_up(max(L, 1), 128)            # lane-dense output
    if Lp != L:
        w2 = jnp.pad(w2, ((0, 0), (0, Lp - L)))
        b2 = jnp.pad(b2, ((0, 0), (0, Lp - L)))

    B8 = _round_up(B, 8)
    tB = min(B8, 256)
    B_pad = _round_up(B, tB)
    if B_pad != B:
        cls_vec = jnp.pad(cls_vec, ((0, B_pad - B), (0, 0)))
        span_vec = jnp.pad(span_vec, ((0, B_pad - B), (0, 0)))

    mlp_vmem = (4 * 2 * (2 * H * H + H * Lp + H + Lp + 2 * tB * H + tB * Lp)
                + 4 * 1024 * 1024)
    mlp_vmem = min(max(mlp_vmem, 16 * 1024 * 1024), vmem_clamp)

    out = pl.pallas_call(
        span_head_mlp_kernel,
        out_shape=jax.ShapeDtypeStruct((B_pad, Lp), out_dtype),
        grid_spec=pltpu.PrefetchScalarGridSpec(
            num_scalar_prefetch=0,
            grid=(B_pad // tB,),
            in_specs=[
                pl.BlockSpec((tB, H), lambda i: (i, 0)),
                pl.BlockSpec((tB, H), lambda i: (i, 0)),
                pl.BlockSpec((H, H), lambda i: (0, 0)),
                pl.BlockSpec((H, H), lambda i: (0, 0)),
                pl.BlockSpec((1, H), lambda i: (0, 0)),
                pl.BlockSpec((H, Lp), lambda i: (0, 0)),
                pl.BlockSpec((1, Lp), lambda i: (0, 0)),
            ],
            out_specs=pl.BlockSpec((tB, Lp), lambda i: (i, 0)),
        ),
        compiler_params=pltpu.CompilerParams(
            dimension_semantics=("parallel",),
            vmem_limit_bytes=mlp_vmem,
        ),
    )(cls_vec, span_vec, w1_cls, w1_span, b1, w2, b2)

    return out[:B, :L]


def reference_jax(hidden_states, span_mask, w1_cls, w1_span, b1, w2, b2):
    span_vec = jnp.sum(hidden_states * span_mask[:, :, None], axis=1)
    cls_vec = hidden_states[:, 0, :]
    z = jnp.tanh(cls_vec @ w1_cls + span_vec @ w1_span + b1)
    return z @ w2 + b2


if __name__ == "__main__":
    # Config: hidden_size=32, num_labels=4, batch=2, seq=8.
    B, S, H, L = 2, 8, 32, 4

    key = jax.random.PRNGKey(0)
    k_h, k_m, k_w1, k_b1, k_w2, k_b2 = jax.random.split(key, 6)

    hidden_states = jax.random.normal(k_h, (B, S, H), dtype=jnp.float32)
    # span_mask: binary mask over sequence positions.
    span_mask = (jax.random.uniform(k_m, (B, S)) > 0.5).astype(jnp.float32)

    # Parameters (PyTorch-style uniform(-1/sqrt(fan_in), 1/sqrt(fan_in))),
    # stored transposed as [in_features, out_features].
    bound1 = 1.0 / (2 * H) ** 0.5
    w1 = jax.random.uniform(k_w1, (2 * H, H), minval=-bound1, maxval=bound1,
                            dtype=jnp.float32)
    b1 = jax.random.uniform(k_b1, (1, H), minval=-bound1, maxval=bound1,
                            dtype=jnp.float32)
    w1_cls, w1_span = w1[:H, :], w1[H:, :]

    bound2 = 1.0 / H ** 0.5
    w2 = jax.random.uniform(k_w2, (H, L), minval=-bound2, maxval=bound2,
                            dtype=jnp.float32)
    b2 = jax.random.uniform(k_b2, (1, L), minval=-bound2, maxval=bound2,
                            dtype=jnp.float32)

    out = longformer_span_head(hidden_states, span_mask, w1_cls, w1_span, b1,
                               w2, b2)
    out = jax.block_until_ready(out)

    ref = reference_jax(hidden_states, span_mask, w1_cls, w1_span, b1, w2, b2)
    assert out.shape == (B, L)
    assert jnp.allclose(out, ref, atol=1e-4, rtol=1e-4)

    print("KERNEL_OK")
</pallas_src>

<mosaic_0001>
module attributes {stable_mosaic.version = 11 : i64} {
  func.func @span_reduce_kernel(%arg0: i32, %arg1: i32, %arg2: memref<1x8x32xf32, #tpu.memory_space<vmem>>, %arg3: memref<1x8x1xf32, #tpu.memory_space<vmem>>, %arg4: memref<1x1x32xf32, #tpu.memory_space<vmem>>, %arg5: memref<1x1x32xf32, #tpu.memory_space<vmem>>) attributes {dimension_semantics = [#tpu.dimension_semantics<parallel>, #tpu.dimension_semantics<arbitrary>], iteration_bounds = array<i64: 2, 1>, scalar_prefetch = 0 : i64, scratch_operands = 0 : i64, tpu.core_type = #tpu.core_type<tc>, window_params = [{transform_indices = @transform_0, window_bounds = array<i64: 1, 8, 32>}, {transform_indices = @transform_1, window_bounds = array<i64: 1, 8, 1>}, {transform_indices = @transform_2, window_bounds = array<i64: 1, 1, 32>}, {transform_indices = @transform_3, window_bounds = array<i64: 1, 1, 32>}]} {
    %c0_i32 = arith.constant 0 : i32
    %0 = arith.cmpi eq, %arg1, %c0_i32 : i32
    %1 = arith.extui %0 : i1 to i32
    %c0_i32_0 = arith.constant 0 : i32
    %2 = arith.cmpi ne, %1, %c0_i32_0 : i32
    scf.if %2 {
      %cst_12 = arith.constant 0.000000e+00 : f32
      %15 = vector.broadcast %cst_12 : f32 to vector<1x1x32xf32>
      %c0_13 = arith.constant 0 : index
      %c0_14 = arith.constant 0 : index
      %c0_15 = arith.constant 0 : index
      %16 = vector.load %arg5[%c0_13, %c0_14, %c0_15] : memref<1x1x32xf32, #tpu.memory_space<vmem>>, vector<1x1x32xf32>
      tpu.vector_store %arg5[%c0_13, %c0_14, %c0_15], %15 {strides = array<i32>} : memref<1x1x32xf32, #tpu.memory_space<vmem>>, vector<1x1x32xf32>,
      %c0_16 = arith.constant 0 : index
      %c0_17 = arith.constant 0 : index
      %c0_18 = arith.constant 0 : index
      %17 = vector.load %arg2[%c0_16, %c0_17, %c0_18] : memref<1x8x32xf32, #tpu.memory_space<vmem>>, vector<1x1x32xf32>
      %c0_19 = arith.constant 0 : index
      %c0_20 = arith.constant 0 : index
      %c0_21 = arith.constant 0 : index
      %18 = vector.load %arg4[%c0_19, %c0_20, %c0_21] : memref<1x1x32xf32, #tpu.memory_space<vmem>>, vector<1x1x32xf32>
      tpu.vector_store %arg4[%c0_19, %c0_20, %c0_21], %17 {strides = array<i32>} : memref<1x1x32xf32, #tpu.memory_space<vmem>>, vector<1x1x32xf32>,
    } else {
    }
    %c0 = arith.constant 0 : index
    %c0_1 = arith.constant 0 : index
    %c0_2 = arith.constant 0 : index
    %3 = vector.load %arg2[%c0, %c0_1, %c0_2] : memref<1x8x32xf32, #tpu.memory_space<vmem>>, vector<1x8x32xf32>
    %4 = vector.shape_cast %3 : vector<1x8x32xf32> to vector<8x32xf32>
    %c0_3 = arith.constant 0 : index
    %c0_4 = arith.constant 0 : index
    %c0_5 = arith.constant 0 : index
    %5 = vector.load %arg3[%c0_3, %c0_4, %c0_5] : memref<1x8x1xf32, #tpu.memory_space<vmem>>, vector<1x8x1xf32>
    %6 = vector.shape_cast %5 : vector<1x8x1xf32> to vector<8x1xf32>
    %7 = vector.broadcast %6 : vector<8x1xf32> to vector<8x32xf32>
    %8 = arith.mulf %4, %7 : vector<8x32xf32>
    %cst = arith.constant dense<0.000000e+00> : vector<32xf32>
    %9 = vector.multi_reduction <add>, %8, %cst [0] : vector<8x32xf32> to vector<32xf32>
    %10 = vector.shape_cast %9 : vector<32xf32> to vector<1x32xf32>
    %c0_6 = arith.constant 0 : index
    %c0_7 = arith.constant 0 : index
    %c0_8 = arith.constant 0 : index
    %11 = vector.load %arg5[%c0_6, %c0_7, %c0_8] : memref<1x1x32xf32, #tpu.memory_space<vmem>>, vector<1x1x32xf32>
    %12 = vector.shape_cast %10 : vector<1x32xf32> to vector<1x1x32xf32>
    %13 = arith.addf %11, %12 : vector<1x1x32xf32>
    %c0_9 = arith.constant 0 : index
    %c0_10 = arith.constant 0 : index
    %c0_11 = arith.constant 0 : index
    %14 = vector.load %arg5[%c0_9, %c0_10, %c0_11] : memref<1x1x32xf32, #tpu.memory_space<vmem>>, vector<1x1x32xf32>
    tpu.vector_store %arg5[%c0_9, %c0_10, %c0_11], %13 {strides = array<i32>} : memref<1x1x32xf32, #tpu.memory_space<vmem>>, vector<1x1x32xf32>,
    return
  }
  func.func @transform_0(%arg0: i32, %arg1: i32) -> (i32, i32, i32) {
    %c0_i32 = arith.constant 0 : i32
    %c0_i32_0 = arith.constant 0 : i32
    return %arg0, %arg1, %c0_i32 : i32, i32, i32
  }
  func.func @transform_1(%arg0: i32, %arg1: i32) -> (i32, i32, i32) {
    %c0_i32 = arith.constant 0 : i32
    %c0_i32_0 = arith.constant 0 : i32
    return %arg0, %arg1, %c0_i32 : i32, i32, i32
  }
  func.func @transform_2(%arg0: i32, %arg1: i32) -> (i32, i32, i32) {
    %c0_i32 = arith.constant 0 : i32
    %c0_i32_0 = arith.constant 0 : i32
    %c0_i32_1 = arith.constant 0 : i32
    return %arg0, %c0_i32, %c0_i32_0 : i32, i32, i32
  }
  func.func @transform_3(%arg0: i32, %arg1: i32) -> (i32, i32, i32) {
    %c0_i32 = arith.constant 0 : i32
    %c0_i32_0 = arith.constant 0 : i32
    %c0_i32_1 = arith.constant 0 : i32
    return %arg0, %c0_i32, %c0_i32_0 : i32, i32, i32
  }
}

</mosaic_0001>

<llo_original>
// kernel: tpu_custom_call.1
$region0: #{tpu_custom_call.1}
  #allocation0 [shape = 'u32[]', space=smem, size = 0x4, offset = 0x4, fixed_abs, tag = 'smem constant byte address 0x4 - core index']
  #allocation1 [shape = 'u32[144,128]{1,0:T(1,128)}', space=vmem, size = 0x12000, scoped, tag = 'internal scratch']
  %s0 = inlined_call_operand.vmem [shape: f32[2,8,32], index: 0, kind: input, shape index: {}]
  %s1 = inlined_call_operand.vmem [shape: f32[2,8,1], index: 1, kind: input, shape index: {}]
  %s2 = inlined_call_operand.hbm [shape: f32[2,1,32], index: 2, kind: output, shape index: {0}]
  %s3 = inlined_call_operand.hbm [shape: f32[2,1,32], index: 3, kind: output, shape index: {1}]
  %4 = xla_tuple %s2, %s3
  %s5 = sld [smem:[#allocation0]]
  $region53: #{tpu_custom_call.1} parent=0
    _
  %s7 = ssub.s32 1, %s5
  %s8 = scalar_select 0, %s7, %s5
  $region1: #{tpu_custom_call.1} parent=0
    #allocation2 [shape = 'u8[1024]{0}', space=vmem, size = 0x400, scoped, tag = 'output window, operand 0']
    #allocation3 [shape = 's32[2]{0}', space=sflag, size = 0x8, scoped, tag = 'scoped memory for tpu_custom_call.1']
    #allocation4 [shape = 'u8[1024]{0}', space=vmem, size = 0x400, scoped, tag = 'output window, operand 1']
    #allocation5 [shape = 's32[2]{0}', space=sflag, size = 0x8, scoped, tag = 'scoped memory for tpu_custom_call.1']
    %9 = vsyncpa [#allocation3], 0
    %s10 = scalar_lea.sflag [#allocation3], 1
    %11 = vsyncpa %s10, 0
    %12 = vsyncpa [#allocation5], 0
    %s13 = scalar_lea.sflag [#allocation5], 1
    %14 = vsyncpa %s13, 0
    loop: start=0, step=1, limit=4
    $region2: #{tpu_custom_call.1} parent=1 // loop_pre_header
      _
    $region3: #{tpu_custom_call.1} parent=1 // loop_header
      %s16 = sphi 0, %s20
      %p17 = scmp.ge.s32.totalorder %s16, 4
      %s23 = sphi 0, %s35
      %s24 = sphi 0, %s31
      %s25 = sphi 0, %s23
      %s26 = sphi 0, %s24
      %s27 = sphi 0, %s25
      %s28 = sphi 0, %s26
      %s40 = sphi 0, %s42
      %s43 = sphi 0, %s40
      %s44 = sphi 0, %s43
      %s60 = sphi 0, %s44
      %s68 = sphi 0, %s70
      %s71 = sphi 0, %s68
      %s72 = sphi 0, %s71
      %s88 = sphi 0, %s72
      %s94 = sphi 0, %s96
      %s97 = sphi 0, %s94
      %s98 = sphi 0, %s97
      %s114 = sphi 0, %s98
      %s120 = sphi 0, %s122
      %s123 = sphi 0, %s120
      %s124 = sphi 0, %s123
      %s140 = sphi 0, %s124
    $region4: #{tpu_custom_call.1} parent=1 // loop_header_branch
      %19 = sbr.rel (%p17) target = $region8
    $region5: #{tpu_custom_call.1} parent=1 // loop_body
      %s21 = ssub.s32 %s16, 1
      %s22 = ssub.s32 %s16, 2
      %s29 = sadd.s32 1, %s24
      %p30 = scmp.ge.s32.totalorder %s29, 1
      %s31 = scalar_select %p30, 0, %s29
      %s32 = sadd.s32 1, %s23
      %s33 = scalar_select %p30, %s32, %s23
      %p34 = scmp.ge.s32.totalorder %s33, 2
      %s35 = scalar_select %p34, 0, %s33
      %s36 = ssub.s32 %s23, %s35
      %s37 = ssub.s32 %s24, %s31
      %s38 = sor.u32 %s36, %s37
      %p39 = scmp.eq.s32.totalorder %s38, 0
      %s41 = sadd.s32 %s40, 1
      %s42 = scalar_select %p39, %s40, %s41
      %p45 = pneg %p39
      %p46 = scmp.eq.s32.totalorder %s16, 1
      %p47 = por %p45, %p46
      %p48 = scmp.ne.s32.totalorder %s40, %s43
      %p49 = scmp.eq.s32.totalorder %s16, 0
      %p50 = por %p48, %p49
      %p51 = scmp.ne.s32.totalorder %s40, %s43
      %p52 = scmp.eq.s32.totalorder %s21, 1
      %p53 = por %p51, %p52
      %p54 = scmp.ne.s32.totalorder %s43, %s44
      %p55 = scmp.eq.s32.totalorder %s21, 0
      %p56 = por %p54, %p55
      %p57 = scmp.ne.s32.totalorder %s43, %s44
      %p58 = scmp.eq.s32.totalorder %s22, 1
      %p59 = por %p57, %p58
      %p61 = scmp.ne.s32.totalorder %s44, %s60
      %p62 = scmp.eq.s32.totalorder %s22, 0
      %p63 = por %p61, %p62
      %s64 = ssub.s32 %s23, %s35
      %s65 = ssub.s32 %s24, %s31
      %s66 = sor.u32 %s64, %s65
      %p67 = scmp.eq.s32.totalorder %s66, 0
      %s69 = sadd.s32 %s68, 1
      %s70 = scalar_select %p67, %s68, %s69
      %p73 = pneg %p67
      %p74 = scmp.eq.s32.totalorder %s16, 1
      %p75 = por %p73, %p74
      %p76 = scmp.ne.s32.totalorder %s68, %s71
      %p77 = scmp.eq.s32.totalorder %s16, 0
      %p78 = por %p76, %p77
      %p79 = scmp.ne.s32.totalorder %s68, %s71
      %p80 = scmp.eq.s32.totalorder %s21, 1
      %p81 = por %p79, %p80
      %p82 = scmp.ne.s32.totalorder %s71, %s72
      %p83 = scmp.eq.s32.totalorder %s21, 0
      %p84 = por %p82, %p83
      %p85 = scmp.ne.s32.totalorder %s71, %s72
      %p86 = scmp.eq.s32.totalorder %s22, 1
      %p87 = por %p85, %p86
      %p89 = scmp.ne.s32.totalorder %s72, %s88
      %p90 = scmp.eq.s32.totalorder %s22, 0
      %p91 = por %p89, %p90
      %s92 = ssub.s32 %s23, %s35
      %p93 = scmp.eq.s32.totalorder %s92, 0
      %s95 = sadd.s32 %s94, 1
      %s96 = scalar_select %p93, %s94, %s95
      %p99 = pneg %p93
      %p100 = scmp.eq.s32.totalorder %s16, 1
      %p101 = por %p99, %p100
      %p102 = scmp.ne.s32.totalorder %s94, %s97
      %p103 = scmp.eq.s32.totalorder %s16, 0
      %p104 = por %p102, %p103
      %p105 = scmp.ne.s32.totalorder %s94, %s97
      %p106 = scmp.eq.s32.totalorder %s21, 1
      %p107 = por %p105, %p106
      %p108 = scmp.ne.s32.totalorder %s97, %s98
      %p109 = scmp.eq.s32.totalorder %s21, 0
      %p110 = por %p108, %p109
      %p111 = scmp.ne.s32.totalorder %s97, %s98
      %p112 = scmp.eq.s32.totalorder %s22, 1
      %p113 = por %p111, %p112
      %p115 = scmp.ne.s32.totalorder %s98, %s114
      %p116 = scmp.eq.s32.totalorder %s22, 0
      %p117 = por %p115, %p116
      %s118 = ssub.s32 %s23, %s35
      %p119 = scmp.eq.s32.totalorder %s118, 0
      %s121 = sadd.s32 %s120, 1
      %s122 = scalar_select %p119, %s120, %s121
      %p125 = pneg %p119
      %p126 = scmp.eq.s32.totalorder %s16, 1
      %p127 = por %p125, %p126
      %p128 = scmp.ne.s32.totalorder %s120, %s123
      %p129 = scmp.eq.s32.totalorder %s16, 0
      %p130 = por %p128, %p129
      %p131 = scmp.ne.s32.totalorder %s120, %s123
      %p132 = scmp.eq.s32.totalorder %s21, 1
      %p133 = por %p131, %p132
      %p134 = scmp.ne.s32.totalorder %s123, %s124
      %p135 = scmp.eq.s32.totalorder %s21, 0
      %p136 = por %p134, %p135
      %p137 = scmp.ne.s32.totalorder %s123, %s124
      %p138 = scmp.eq.s32.totalorder %s22, 1
      %p139 = por %p137, %p138
      %p141 = scmp.ne.s32.totalorder %s124, %s140
      %p142 = scmp.eq.s32.totalorder %s22, 0
      %p143 = por %p141, %p142
      %p144 = scmp.le.s32.totalorder 1, %s16
      %p145 = scmp.lt.s32.totalorder %s16, 3
      %p146 = pnand %p144, %p145
      %p147 = pneg %p146
      // Predicated region
      $region9: #{tpu_custom_call.1} parent=5 // pred_check
        _
      $region10: #{tpu_custom_call.1} parent=5 // pred_check_branch
        %149 = sbr.rel (%p146) target = $region12
      $region11: #{tpu_custom_call.1} parent=5 // pred_region
        %s150 = ssub.s32 %s16, 1
      $region12: #{tpu_custom_call.1} parent=5 // pred_fallthru
        _
      %p151 = scmp.lt.s32.totalorder %s16, 2
      // Predicated region
      $region13: #{tpu_custom_call.1} parent=5 // pred_check
        %p152 = pneg %p151
      $region14: #{tpu_custom_call.1} parent=5 // pred_check_branch
        %154 = sbr.rel (%p152) target = $region16
      $region15: #{tpu_custom_call.1} parent=5 // pred_region
        // Predicated region
        $region17: #{tpu_custom_call.1} parent=15 // pred_check
          %p155 = pneg %p50
        $region18: #{tpu_custom_call.1} parent=15 // pred_check_branch
          %157 = sbr.rel (%p155) target = $region20
        $region19: #{tpu_custom_call.1} parent=15 // pred_region
          %p158 = scmp.lt.s32.totalorder %s23, 1
          %s159 = scalar_select %p158, %s23, 1
          %p160 = scmp.lt.s32.totalorder %s24, 0
          %s161 = scalar_select %p160, %s24, 0
          %s162 = sadd.s32 %s161, %s159
          %s163 = smul.addr %s162, 8
          %s164 = scalar_lea.vmem %s0, %s163
        $region20: #{tpu_custom_call.1} parent=15 // pred_fallthru
          _
        // Predicated region
        $region21: #{tpu_custom_call.1} parent=15 // pred_check
          %p165 = pneg %p78
        $region22: #{tpu_custom_call.1} parent=15 // pred_check_branch
          %167 = sbr.rel (%p165) target = $region24
        $region23: #{tpu_custom_call.1} parent=15 // pred_region
          %p168 = scmp.lt.s32.totalorder %s23, 1
          %s169 = scalar_select %p168, %s23, 1
          %p170 = scmp.lt.s32.totalorder %s24, 0
          %s171 = scalar_select %p170, %s24, 0
          %s172 = sadd.s32 %s171, %s169
          %s173 = smul.addr %s172, 8
          %s174 = scalar_lea.vmem %s1, %s173
        $region24: #{tpu_custom_call.1} parent=15 // pred_fallthru
          _
      $region16: #{tpu_custom_call.1} parent=5 // pred_fallthru
        _
      %p175 = scmp.le.s32.totalorder 1, %s16
      %p176 = scmp.lt.s32.totalorder %s16, 3
      %p177 = pnand %p175, %p176
      %p178 = pneg %p177
      // Predicated region
      $region25: #{tpu_custom_call.1} parent=5 // pred_check
        _
      $region26: #{tpu_custom_call.1} parent=5 // pred_check_branch
        %180 = sbr.rel (%p177) target = $region28
      $region27: #{tpu_custom_call.1} parent=5 // pred_region
        %s181 = ssub.s32 %s16, 1
        %p182 = scmp.lt.s32.totalorder %s25, 1
        %s183 = scalar_select %p182, %s25, 1
        %p184 = scmp.lt.s32.totalorder %s26, 0
        %s185 = scalar_select %p184, %s26, 0
        %s186 = sadd.s32 %s185, %s183
        %s187 = smul.addr %s186, 8
        %s188 = scalar_lea.vmem %s0, %s187
        %p189 = pneg %p56
        %p190 = pneg %p53
        %p191 = scmp.lt.s32.totalorder %s25, 1
        %s192 = scalar_select %p191, %s25, 1
        %p193 = scmp.lt.s32.totalorder %s26, 0
        %s194 = scalar_select %p193, %s26, 0
        %s195 = sadd.s32 %s194, %s192
        %s196 = smul.addr %s195, 8
        %s197 = scalar_lea.vmem %s1, %s196
        %p198 = pneg %p84
        %p199 = pneg %p81
        %p200 = pneg %p110
        %p201 = pneg %p107
        %s202 = sand.u32 %s97, 1
        %s203 = scalar_lea.sflag [#allocation3], %s202
        %s204 = sand.u32 %s97, 1
        %s205 = scalar_lea.vmem [#allocation2], %s204
        %p206 = pneg %p136
        %p207 = pneg %p133
        %s208 = sand.u32 %s123, 1
        %s209 = scalar_lea.sflag [#allocation5], %s208
        %s210 = sand.u32 %s123, 1
        %s211 = scalar_lea.vmem [#allocation4], %s210
        %p212 = scmp.lt.s32.totalorder %s25, 1
        %s213 = scalar_select %p212, %s25, 1
        %p214 = scmp.lt.s32.totalorder %s26, 0
        %s215 = scalar_select %p214, %s26, 0
        %s216 = sadd.s32 %s215, %s213
        %s217 = smul.addr %s216, 8
        %s218 = scalar_lea.vmem %s0, %s217
        %p219 = scmp.lt.s32.totalorder %s25, 1
        %s220 = scalar_select %p219, %s25, 1
        %p221 = scmp.lt.s32.totalorder %s26, 0
        %s222 = scalar_select %p221, %s26, 0
        %s223 = sadd.s32 %s222, %s220
        %s224 = smul.addr %s223, 8
        %s225 = scalar_lea.vmem %s1, %s224
        %p226 = scmp.eq.s32.totalorder %s26, 0
        // Predicated region
        $region29: #{tpu_custom_call.1} parent=27 // pred_check
          %p227 = pneg %p226
        $region30: #{tpu_custom_call.1} parent=27 // pred_check_branch
          %229 = sbr.rel (%p227) target = $region32
        $region31: #{tpu_custom_call.1} parent=27 // pred_region
          %vm230 = vcmask 253952
          %231 = vst.msk [vmem:[%s211] sm:$0x1] %vm230, 0.0
          %v232 = vld [vmem:[%s218] sm:$0x1]
          %233 = vst.msk [vmem:[%s205] sm:$0x1] %vm230, %v232
        $region32: #{tpu_custom_call.1} parent=27 // pred_fallthru
          _
        %v234 = vld [vmem:[%s218] sm:$0xff]
        %v235 = vld [vmem:[%s225] sm:$0xff]
        %237 = vset.pattern.permute.xlu0 0
        %238 = vperm.xlu0 %237, %v235
        %v239 = vpop.permute.xlu0 %238
        %v241 = vmul.f32 %v234, %v239
        %vm242 = vcmask 261120
        %v243 = vsel %vm242, %v241, 0.0
        %v244 = vrot.slane %v243, 4
        %v245 = vadd.f32 %v243, %v244
        %v246 = vrot.slane %v245, 2
        %v247 = vadd.f32 %v245, %v246
        %v248 = vrot.slane %v247, 1
        %v249 = vadd.f32 %v247, %v248
        %v250 = vld [vmem:[%s211] sm:$0x1]
        %v251 = vadd.f32 %v250, %v249
        %vm252 = vcmask 253952
        %253 = vst.msk [vmem:[%s211] sm:$0x1] %vm252, %v251
        %s254 = sand.u32 %s97, 1
        %s255 = scalar_lea.sflag [#allocation3], %s254
        %s256 = sand.u32 %s97, 1
        %s257 = scalar_lea.vmem [#allocation2], %s256
        %s258 = sand.u32 %s123, 1
        %s259 = scalar_lea.sflag [#allocation5], %s258
        %s260 = sand.u32 %s123, 1
        %s261 = scalar_lea.vmem [#allocation4], %s260
        // Predicated region
        $region33: #{tpu_custom_call.1} parent=27 // pred_check
          %p262 = pneg %p107
        $region34: #{tpu_custom_call.1} parent=27 // pred_check_branch
          %264 = sbr.rel (%p262) target = $region36
        $region35: #{tpu_custom_call.1} parent=27 // pred_region
          %s266 = ssub.s32 16, 16
          %267 = vsyncadd %s255, %s266
          %s268 = smul.addr %s25, 16
          %s269 = scalar_lea.hbm %s2, %s268
          %s271 = sshll.u32 %s257, 4
          %s272 = int_to_ptr.vmem [resolvable:$true] %s271
          %274 = dma.vmem_to_hbm [thread:$0]  %s272, 16, %s269, %s255
        $region36: #{tpu_custom_call.1} parent=27 // pred_fallthru
          _
        // Predicated region
        $region37: #{tpu_custom_call.1} parent=27 // pred_check
          %p275 = pneg %p133
        $region38: #{tpu_custom_call.1} parent=27 // pred_check_branch
          %277 = sbr.rel (%p275) target = $region40
        $region39: #{tpu_custom_call.1} parent=27 // pred_region
          %s279 = ssub.s32 16, 16
          %280 = vsyncadd %s259, %s279
          %s281 = smul.addr %s25, 16
          %s282 = scalar_lea.hbm %s3, %s281
          %s284 = sshll.u32 %s261, 4
          %s285 = int_to_ptr.vmem [resolvable:$true] %s284
          %287 = dma.vmem_to_hbm [thread:$0]  %s285, 16, %s282, %s259
        $region40: #{tpu_custom_call.1} parent=27 // pred_fallthru
          _
      $region28: #{tpu_custom_call.1} parent=5 // pred_fallthru
        _
      %p288 = scmp.le.s32.totalorder 2, %s16
      // Predicated region
      $region41: #{tpu_custom_call.1} parent=5 // pred_check
        %p289 = pneg %p288
      $region42: #{tpu_custom_call.1} parent=5 // pred_check_branch
        %291 = sbr.rel (%p289) target = $region44
      $region43: #{tpu_custom_call.1} parent=5 // pred_region
        %s292 = ssub.s32 %s16, 2
        // Predicated region
        $region45: #{tpu_custom_call.1} parent=43 // pred_check
          %p293 = pneg %p113
        $region46: #{tpu_custom_call.1} parent=43 // pred_check_branch
          %295 = sbr.rel (%p293) target = $region48
        $region47: #{tpu_custom_call.1} parent=43 // pred_region
          %s296 = sand.u32 %s98, 1
          %s297 = scalar_lea.sflag [#allocation3], %s296
          %s298 = sand.u32 %s98, 1
          %s299 = scalar_lea.vmem [#allocation2], %s298
          %300 = dma.done %s297, 16
        $region48: #{tpu_custom_call.1} parent=43 // pred_fallthru
          _
        // Predicated region
        $region49: #{tpu_custom_call.1} parent=43 // pred_check
          %p301 = pneg %p139
        $region50: #{tpu_custom_call.1} parent=43 // pred_check_branch
          %303 = sbr.rel (%p301) target = $region52
        $region51: #{tpu_custom_call.1} parent=43 // pred_region
          %s304 = sand.u32 %s124, 1
          %s305 = scalar_lea.sflag [#allocation5], %s304
          %s306 = sand.u32 %s124, 1
          %s307 = scalar_lea.vmem [#allocation4], %s306
          %308 = dma.done %s305, 16
        $region52: #{tpu_custom_call.1} parent=43 // pred_fallthru
          _
      $region44: #{tpu_custom_call.1} parent=5 // pred_fallthru
        _
    $region6: #{tpu_custom_call.1} parent=1 // loop_footer
      %s20 = sadd.s32 1, %s16
    $region7: #{tpu_custom_call.1} parent=1 // loop_footer_branch
      %15 = sbr.rel target = $region3
    $region8: #{tpu_custom_call.1} parent=1 // loop_exit
      _
    %309 = vsyncpa [#allocation3], 1
    %s310 = scalar_lea.sflag [#allocation3], 1
    %311 = vsyncpa %s310, 1
    %312 = vsyncpa [#allocation5], 1
    %s313 = scalar_lea.sflag [#allocation5], 1
    %314 = vsyncpa %s313, 1

</llo_original>
